<compile_context>
chip_gen: v5e
topology: v5e:2x2
jax: 0.10.0
libtpu: 0.0.40
codegen_flags: <defaults>
</compile_context>

<pallas_src>
import math

import jax
import jax.numpy as jnp
from jax.experimental import pallas as pl
from jax.experimental.pallas import tpu as pltpu


def _dma_copy_kernel(x_hbm, o_hbm, sem):
    # One direct HBM->HBM DMA per grid step, copying this step's chunk.
    # No VMEM staging, no vld/vst — the DMA engine drives HBM directly.
    i = pl.program_id(0)
    cp = pltpu.make_async_copy(x_hbm.at[i], o_hbm.at[i], sem)
    cp.start()
    cp.wait()


def _choose_view(total):
    """Pick a (num_chunks, chunk_rows, cols) factorization of `total`.

    The shape is irrelevant to the HBM->HBM DMA itself; it only exists so the
    leading axis can be split into >=2 contiguous chunks (one per TensorCore
    on v7x) when the element count allows it.
    """
    cols = None
    for c in (1024, 512, 256, 128):
        if total % c == 0 and total // c >= 2:
            cols = c
            break
    if cols is None:
        # Small / awkward element counts: one chunk holding everything.
        return 1, 1, total
    rows = total // cols
    num_chunks = 2 if rows % 2 == 0 else 1
    return num_chunks, rows // num_chunks, cols


def unsqueeze(x: jax.Array, dim: int) -> jax.Array:
    """Pallas equivalent of torch.Tensor.unsqueeze(dim)."""
    ndim = x.ndim
    # torch semantics: dim can be in [-(ndim+1), ndim]
    if dim < 0:
        dim = dim + ndim + 1
    assert 0 <= dim <= ndim, f"invalid unsqueeze dim {dim} for rank {ndim}"
    out_shape = x.shape[:dim] + (1,) + x.shape[dim:]

    total = math.prod(x.shape) if x.shape else 1
    if total == 0:
        # Nothing to copy; unsqueeze is pure metadata.
        return x.reshape(out_shape)

    num_chunks, chunk_rows, cols = _choose_view(total)

    # Contiguous view of the same data (metadata-only reshape, outside the
    # kernel, costs nothing).
    x3 = x.reshape(num_chunks, chunk_rows, cols)

    y3 = pl.pallas_call(
        _dma_copy_kernel,
        out_shape=jax.ShapeDtypeStruct((num_chunks, chunk_rows, cols), x.dtype),
        grid=(num_chunks,),
        in_specs=[pl.BlockSpec(memory_space=pl.ANY)],
        out_specs=pl.BlockSpec(memory_space=pl.ANY),
        scratch_shapes=[pltpu.SemaphoreType.DMA],
        compiler_params=pltpu.CompilerParams(
            dimension_semantics=("parallel",)),
    )(x3)

    # The unsqueeze itself: reshape back (free, outside the kernel) into the
    # shape containing the inserted singleton axis.
    return y3.reshape(out_shape)


if __name__ == "__main__":
    key = jax.random.PRNGKey(0)
    # Module with dim=1, NCHW input (N=2, C=4, H=16, W=16)
    dim = 1
    x = jax.random.normal(key, (2, 4, 16, 16), dtype=jnp.float32)

    y = unsqueeze(x, dim)
    jax.block_until_ready(y)

    # Reference check against plain JAX expand_dims (== torch.unsqueeze)
    y_ref = jnp.expand_dims(x, dim)
    assert y.shape == (2, 1, 4, 16, 16), y.shape
    assert y.dtype == x.dtype
    assert bool(jnp.array_equal(y, y_ref))

    print("KERNEL_OK")
</pallas_src>

<mosaic_0001>
module attributes {stable_mosaic.version = 11 : i64} {
  func.func @_dma_copy_kernel(%arg0: i32, %arg1: memref<2x1x1024xf32, #tpu.memory_space<any>>, %arg2: memref<2x1x1024xf32, #tpu.memory_space<any>>, %arg3: memref<!tpu.dma_semaphore, #tpu.memory_space<semaphore_mem>>) attributes {dimension_semantics = [#tpu.dimension_semantics<parallel>], iteration_bounds = array<i64: 2>, scalar_prefetch = 0 : i64, scratch_operands = 1 : i64, tpu.core_type = #tpu.core_type<tc>, window_params = [{}, {}]} {
    %c0_i32 = arith.constant 0 : i32
    %c0_i32_0 = arith.constant 0 : i32
    %0 = tpu.memref_slice %arg1[%arg0, %c0_i32, %c0_i32_0] : memref<2x1x1024xf32, #tpu.memory_space<any>> -> memref<1x1x1024xf32, #tpu.memory_space<any>>
    %1 = tpu.memref_squeeze %0 : memref<1x1x1024xf32, #tpu.memory_space<any>> -> memref<1x1024xf32, #tpu.memory_space<any>>
    %c0_i32_1 = arith.constant 0 : i32
    %c0_i32_2 = arith.constant 0 : i32
    %2 = tpu.memref_slice %arg2[%arg0, %c0_i32_1, %c0_i32_2] : memref<2x1x1024xf32, #tpu.memory_space<any>> -> memref<1x1x1024xf32, #tpu.memory_space<any>>
    %3 = tpu.memref_squeeze %2 : memref<1x1x1024xf32, #tpu.memory_space<any>> -> memref<1x1024xf32, #tpu.memory_space<any>>
    tpu.enqueue_dma source(%1 : memref<1x1024xf32, #tpu.memory_space<any>>) target(%3 : memref<1x1024xf32, #tpu.memory_space<any>>) target_semaphore(%arg3 : memref<!tpu.dma_semaphore, #tpu.memory_space<semaphore_mem>>)
    %c0_i32_3 = arith.constant 0 : i32
    %c0_i32_4 = arith.constant 0 : i32
    %4 = tpu.memref_slice %arg1[%arg0, %c0_i32_3, %c0_i32_4] : memref<2x1x1024xf32, #tpu.memory_space<any>> -> memref<1x1x1024xf32, #tpu.memory_space<any>>
    %5 = tpu.memref_squeeze %4 : memref<1x1x1024xf32, #tpu.memory_space<any>> -> memref<1x1024xf32, #tpu.memory_space<any>>
    %c0_i32_5 = arith.constant 0 : i32
    %c0_i32_6 = arith.constant 0 : i32
    %6 = tpu.memref_slice %arg2[%arg0, %c0_i32_5, %c0_i32_6] : memref<2x1x1024xf32, #tpu.memory_space<any>> -> memref<1x1x1024xf32, #tpu.memory_space<any>>
    %7 = tpu.memref_squeeze %6 : memref<1x1x1024xf32, #tpu.memory_space<any>> -> memref<1x1024xf32, #tpu.memory_space<any>>
    tpu.wait_dma2 semaphore(%arg3 : memref<!tpu.dma_semaphore, #tpu.memory_space<semaphore_mem>>) src(%5 : memref<1x1024xf32, #tpu.memory_space<any>>) dst(%7 : memref<1x1024xf32, #tpu.memory_space<any>>)
    return
  }
}

</mosaic_0001>

<llo_original>
// kernel: tpu_custom_call.1
$region0: #{tpu_custom_call.1}
  #allocation0 [shape = 'u32[]', space=smem, size = 0x4, offset = 0x4, fixed_abs, tag = 'smem constant byte address 0x4 - core index']
  #allocation1 [shape = 'u32[72,128]{1,0:T(1,128)}', space=vmem, size = 0x9000, scoped, tag = 'internal scratch']
  #allocation2 [shape = 's32[1]{0}', space=sflag, size = 0x4, scoped, tag = 'scratch operand']
  #allocation3 [shape = 's32[]', space=sflag, size = 0x4, offset = 0, fixed_abs, tag = 'sflag constant byte address 0x0 - dummy sync flag']
  #allocation4 [shape = 'u32[0]{0}', space=smem, size = 0, offset = 0, fixed_abs, tag = 'smem constant byte address 0x0 - null']
  %s0 = inlined_call_operand.hbm [shape: f32[2,1,1024], index: 0, kind: input, shape index: {}]
  %s1 = inlined_call_operand.hbm [shape: f32[2,1,1024], index: 1, kind: output, shape index: {}]
  %s2 = sld [smem:[#allocation0]]
  $region9: #{tpu_custom_call.1} parent=0
    _
  %s4 = ssub.s32 1, %s2
  %s5 = scalar_select 0, %s4, %s2
  loop: start=0, step=1, limit=2
  $region2: #{tpu_custom_call.1} parent=0 // loop_pre_header
    _
  $region3: #{tpu_custom_call.1} parent=0 // loop_header
    %s7 = sphi 0, %s11
    %p8 = scmp.ge.s32.totalorder %s7, 2
  $region4: #{tpu_custom_call.1} parent=0 // loop_header_branch
    %10 = sbr.rel (%p8) target = $region8
  $region5: #{tpu_custom_call.1} parent=0 // loop_body
    %s12 = sadd.s32 %s7, 1
    %s13 = smul.u32 %s7, 8
    %s14 = scalar_lea.hbm %s0, %s13
    %s15 = scalar_lea.hbm %s1, %s13
    %s17 = sshll.u32 1, 14
    %s18 = sxor.u32 4294967295, %s17
    %s20 = sshll.u32 %s14, 4
    %s21 = int_to_ptr.hbm [resolvable:$true] %s20
    %s22 = sshll.u32 %s15, 4
    %s23 = int_to_ptr.hbm [resolvable:$true] %s22
    %26 = dma.general %s21, 128, %s23, [#allocation2], [#allocation3], [#allocation4], 0, 0
    %s27 = smul.u32 1, 8
    %s28 = sshll.u32 %s27, 4
    %29 = dma.done [#allocation2], %s28
  $region6: #{tpu_custom_call.1} parent=0 // loop_footer
    %s11 = sadd.s32 1, %s7
  $region7: #{tpu_custom_call.1} parent=0 // loop_footer_branch
    %6 = sbr.rel target = $region3
  $region8: #{tpu_custom_call.1} parent=0 // loop_exit
    _
  %30 = vsyncmov [#allocation2]
  %s31 = vpop.sfrf %30
  %p32 = scmp.eq.s32.totalorder %s31, 0
  %p33 = pneg %p32
  %35 = shalt.err (%p33)

</llo_original>
